<compile_context>
chip_gen: v6e
topology: v6e:2x2x1
jax: 0.10.0
libtpu: 0.0.40
codegen_flags: <defaults>
</compile_context>

<pallas_src>
import functools

import jax
import jax.numpy as jnp
from jax.experimental import pallas as pl
from jax.experimental.pallas import tpu as pltpu

_LANE = 128
_GROUP_ROWS = 64            # channel rows per partial group (ps+pm <= 16 vregs)
_MAX_UNROLL_BODIES = 512    # cap on statically unrolled chunk bodies per grid step
_HARD_VMEM_CAP = 48 << 20   # safe against v7x's 64 MiB VMEM per TensorCore


def _accumulate_tile(x_ref, sum_acc, max_acc, width):
    """Fold `width` valid lanes of the current (tn, C, t_hw) tile into scratch.

    Everything is per-128-lane chunk: load -> upcast -> add/max in vregs, with
    small (<= 64 rows x 128 lanes) live partials flushed once per group.
    `width` is static, so padded lanes of the last tile are simply never read.
    """
    tn, C, _ = x_ref.shape
    n_full = width // _LANE
    tail = width % _LANE
    cgs = min(C, _GROUP_ROWS)

    for n in range(tn):
        for c0 in range(0, C, cgs):
            cg = min(cgs, C - c0)
            if n_full > 0:
                # First chunk seeds both partials (avoids a -inf/zero init).
                ps = x_ref[n, c0:c0 + cg, 0:_LANE].astype(jnp.float32)
                pm = ps
                for c in range(1, n_full):
                    lo = c * _LANE
                    chunk = x_ref[n, c0:c0 + cg, lo:lo + _LANE].astype(jnp.float32)
                    ps = ps + chunk
                    pm = jnp.maximum(pm, chunk)
                sum_acc[n, c0:c0 + cg, :] += ps
                max_acc[n, c0:c0 + cg, :] = jnp.maximum(
                    max_acc[n, c0:c0 + cg, :], pm)
            if tail > 0:
                # Partial tail chunk (only exists on the last HW step / when
                # HW < 128): read just the valid lanes, fold into lane 0.
                lo = n_full * _LANE
                ctail = x_ref[n, c0:c0 + cg, lo:lo + tail].astype(jnp.float32)
                sum_acc[n, c0:c0 + cg, 0:1] += jnp.sum(
                    ctail, axis=-1, keepdims=True)
                max_acc[n, c0:c0 + cg, 0:1] = jnp.maximum(
                    max_acc[n, c0:c0 + cg, 0:1],
                    jnp.max(ctail, axis=-1, keepdims=True))


def _channel_attention_kernel(x_ref, w1t_ref, w2t_ref, o_ref, sum_acc, max_acc,
                              *, hw_total, t_hw, rem):
    # x_ref:   (tn, C, t_hw)  native dtype
    # w1t_ref: (C, CH) f32    (fc[0].weight transposed)
    # w2t_ref: (CH, C) f32    (fc[2].weight transposed)
    # o_ref:   (tn, C)        native dtype
    # sum_acc / max_acc: (tn, C, 128) f32 scratch accumulators
    k = pl.program_id(1)
    last_k = pl.num_programs(1) - 1

    @pl.when(k == 0)
    def _init():
        sum_acc[...] = jnp.zeros_like(sum_acc)
        max_acc[...] = jnp.full_like(max_acc, -jnp.inf)

    if rem == t_hw:
        # Every HW step is fully valid: single unmasked path.
        _accumulate_tile(x_ref, sum_acc, max_acc, t_hw)
    else:
        # Unmasked path on all but the last step; only the last step pays for
        # the (statically known) remainder width.
        @pl.when(k != last_k)
        def _full():
            _accumulate_tile(x_ref, sum_acc, max_acc, t_hw)

        @pl.when(k == last_k)
        def _last():
            _accumulate_tile(x_ref, sum_acc, max_acc, rem)

    @pl.when(k == last_k)
    def _finalize():
        # Single cross-lane (XLU) reduce, tiny fused FC, sigmoid, store.
        avg = jnp.sum(sum_acc[...], axis=-1) * (1.0 / float(hw_total))   # (tn, C)
        mx = jnp.max(max_acc[...], axis=-1)                              # (tn, C)
        tn = avg.shape[0]
        p = jnp.concatenate([avg, mx], axis=0)                           # (2tn, C)
        h = jnp.maximum(
            jnp.dot(p, w1t_ref[...], preferred_element_type=jnp.float32), 0.0)
        h_sum = h[:tn, :] + h[tn:, :]                                    # (tn, CH)
        out = jnp.dot(h_sum, w2t_ref[...], preferred_element_type=jnp.float32)
        o_ref[...] = jax.nn.sigmoid(out).astype(o_ref.dtype)


def _block_budget_bytes():
    """Per-input-block budget, tuned per TPU generation (review items 4/5/6)."""
    budget = 8 << 20                       # safe default on every generation
    try:
        vmem = int(pltpu.get_tpu_info().vmem_capacity_bytes)
        # 128 MiB physical VMEM (v5e/v6e) -> large blocks; 64 MiB (v7x) -> medium.
        budget = (16 << 20) if vmem >= (96 << 20) else (12 << 20)
    except Exception:
        pass
    return budget


def _choose_tiles(N, C, HW, itemsize, lane_cap=None):
    tn = min(N, 8)                         # keeps the (tn, C) output block tile-legal
    row_bytes = tn * C * itemsize
    scratch_bytes = 2 * tn * C * _LANE * 4
    margin = 4 << 20

    budget = _block_budget_bytes()
    # Never let (2 x input buffer + scratch + margin) exceed the hard cap.
    budget = min(budget, max(0, (_HARD_VMEM_CAP - scratch_bytes - margin) // 2))
    if budget < row_bytes * _LANE:
        raise ValueError(
            "ChannelAttention Pallas kernel: minimal block "
            f"(tn={tn}, C={C}, 128 lanes, {row_bytes * _LANE} bytes) plus scratch "
            f"({scratch_bytes} bytes) does not fit the {_HARD_VMEM_CAP} byte VMEM cap.")

    # Cap the number of statically unrolled 128-lane chunk bodies per step.
    cgs = min(C, _GROUP_ROWS)
    n_cgroups = -(-C // cgs)
    max_chunks = max(1, _MAX_UNROLL_BODIES // (tn * n_cgroups))

    max_hw = min((budget // row_bytes) // _LANE, max_chunks) * _LANE
    if lane_cap is not None:               # test hook: force the streaming path
        max_hw = max(_LANE, min(max_hw, (lane_cap // _LANE) * _LANE))
    t_hw = HW if HW <= max_hw else max_hw

    block_bytes = row_bytes * t_hw
    vmem_limit = max(2 * block_bytes + scratch_bytes + margin, 16 << 20)
    return tn, t_hw, vmem_limit


def channel_attention(x_nchw, w1, w2, *, lane_cap=None):
    """x_nchw: (N, C, H, W); w1: (C//16, C); w2: (C, C//16). Returns (N, C, 1, 1)."""
    N, C, H, W = x_nchw.shape
    if w1.ndim == 4:
        w1 = w1[:, :, 0, 0]
    if w2.ndim == 4:
        w2 = w2[:, :, 0, 0]
    CH = w1.shape[0]
    HW = H * W

    # Contiguous reshape only; the big tensor keeps its native dtype.
    x_r = x_nchw.reshape(N, C, HW)
    w1t = jnp.transpose(w1).astype(jnp.float32)   # (C, CH)  tiny
    w2t = jnp.transpose(w2).astype(jnp.float32)   # (CH, C)  tiny

    itemsize = x_r.dtype.itemsize
    tn, t_hw, vmem_limit = _choose_tiles(N, C, HW, itemsize, lane_cap=lane_cap)
    grid_n = pl.cdiv(N, tn)
    grid_hw = pl.cdiv(HW, t_hw)
    rem = HW - (grid_hw - 1) * t_hw               # valid lanes of the last HW step

    kernel = functools.partial(
        _channel_attention_kernel, hw_total=HW, t_hw=t_hw, rem=rem)

    cost = pl.CostEstimate(
        flops=2 * N * C * HW + 8 * N * C * CH,
        transcendentals=N * C,
        bytes_accessed=N * C * HW * itemsize + N * C * itemsize + 2 * C * CH * 4,
    )

    out = pl.pallas_call(
        kernel,
        out_shape=jax.ShapeDtypeStruct((N, C), x_r.dtype),
        grid_spec=pltpu.PrefetchScalarGridSpec(
            num_scalar_prefetch=0,
            grid=(grid_n, grid_hw),
            in_specs=[
                pl.BlockSpec((tn, C, t_hw), lambda n, k: (n, 0, k)),
                pl.BlockSpec((C, CH), lambda n, k: (0, 0)),
                pl.BlockSpec((CH, C), lambda n, k: (0, 0)),
            ],
            out_specs=pl.BlockSpec((tn, C), lambda n, k: (n, 0)),
            scratch_shapes=[
                pltpu.VMEM((tn, C, _LANE), jnp.float32),   # running sum
                pltpu.VMEM((tn, C, _LANE), jnp.float32),   # running max
            ],
        ),
        compiler_params=pltpu.CompilerParams(
            dimension_semantics=("parallel", "arbitrary"),
            vmem_limit_bytes=int(vmem_limit)),
        cost_estimate=cost,
    )(x_r, w1t, w2t)

    return out.reshape(N, C, 1, 1)


def _reference(x, w1, w2):
    N, C, H, W = x.shape
    xr = x.astype(jnp.float32).reshape(N, C, H * W)
    avg = xr.mean(-1)
    mx = xr.max(-1)
    fc = lambda p: jnp.maximum(p @ w1.T, 0.0) @ w2.T
    return jax.nn.sigmoid(fc(avg) + fc(mx)).reshape(N, C, 1, 1)


if __name__ == "__main__":
    # in_planes must be >= 16 so that in_planes // 16 >= 1 (matches the module).
    N, C, H, W = 2, 32, 16, 16
    CH = C // 16

    key = jax.random.PRNGKey(0)
    kx, k1, k2, kx2 = jax.random.split(key, 4)

    x = jax.random.normal(kx, (N, C, H, W), dtype=jnp.float32)
    # Conv2d weights are (out_ch, in_ch, 1, 1); we keep the squeezed (out_ch, in_ch).
    w1 = jax.random.normal(k1, (CH, C), dtype=jnp.float32) * 0.1   # fc[0].weight
    w2 = jax.random.normal(k2, (C, CH), dtype=jnp.float32) * 0.1   # fc[2].weight

    # Test 1: single-block path, f32.
    out = channel_attention(x, w1, w2)
    jax.block_until_ready(out)
    ref = _reference(x, w1, w2)
    assert out.shape == (N, C, 1, 1)
    assert jnp.allclose(out, ref, atol=1e-5, rtol=1e-5)

    # Test 2: streaming + masked-last-tile + tail path, bf16 input
    # (lane_cap forces t_hw=128 so HW=225 is split into a full and a 97-lane step).
    x2 = jax.random.normal(kx2, (N, C, 15, 15), dtype=jnp.bfloat16)
    out2 = channel_attention(x2, w1, w2, lane_cap=128)
    jax.block_until_ready(out2)
    ref2 = _reference(x2, w1, w2)
    assert out2.shape == (N, C, 1, 1)
    assert jnp.allclose(out2.astype(jnp.float32), ref2, atol=2e-2, rtol=2e-2)

    print("KERNEL_OK")
</pallas_src>

<mosaic_0001>
module attributes {stable_mosaic.version = 11 : i64} {
  func.func @_channel_attention_kernel(%arg0: i32, %arg1: i32, %arg2: memref<2x32x256xf32, #tpu.memory_space<vmem>>, %arg3: memref<32x2xf32, #tpu.memory_space<vmem>>, %arg4: memref<2x32xf32, #tpu.memory_space<vmem>>, %arg5: memref<2x32xf32, #tpu.memory_space<vmem>>, %arg6: memref<2x32x128xf32, #tpu.memory_space<vmem>>, %arg7: memref<2x32x128xf32, #tpu.memory_space<vmem>>) attributes {dimension_semantics = [#tpu.dimension_semantics<parallel>, #tpu.dimension_semantics<arbitrary>], iteration_bounds = array<i64: 1, 1>, scalar_prefetch = 0 : i64, scratch_operands = 2 : i64, tpu.core_type = #tpu.core_type<tc>, window_params = [{transform_indices = @transform_0, window_bounds = array<i64: 2, 32, 256>}, {pipeline_mode = #tpu.pipeline_mode<synchronous>, transform_indices = @transform_1, window_bounds = array<i64: 32, 2>}, {pipeline_mode = #tpu.pipeline_mode<synchronous>, transform_indices = @transform_2, window_bounds = array<i64: 2, 32>}, {transform_indices = @transform_3, window_bounds = array<i64: 2, 32>}]} {
    %c0_i32 = arith.constant 0 : i32
    %0 = arith.cmpi eq, %arg1, %c0_i32 : i32
    %1 = arith.extui %0 : i1 to i32
    %c0_i32_0 = arith.constant 0 : i32
    %2 = arith.cmpi ne, %1, %c0_i32_0 : i32
    scf.if %2 {
      %cst = arith.constant 0.000000e+00 : f32
      %42 = vector.broadcast %cst : f32 to vector<2x32x128xf32>
      %c0_36 = arith.constant 0 : index
      %c0_37 = arith.constant 0 : index
      %c0_38 = arith.constant 0 : index
      %43 = vector.load %arg6[%c0_36, %c0_37, %c0_38] : memref<2x32x128xf32, #tpu.memory_space<vmem>>, vector<2x32x128xf32>
      tpu.vector_store %arg6[%c0_36, %c0_37, %c0_38], %42 {strides = array<i32>} : memref<2x32x128xf32, #tpu.memory_space<vmem>>, vector<2x32x128xf32>,
      %cst_39 = arith.constant 0xFF800000 : f32
      %44 = vector.broadcast %cst_39 : f32 to vector<2x32x128xf32>
      %c0_40 = arith.constant 0 : index
      %c0_41 = arith.constant 0 : index
      %c0_42 = arith.constant 0 : index
      %45 = vector.load %arg7[%c0_40, %c0_41, %c0_42] : memref<2x32x128xf32, #tpu.memory_space<vmem>>, vector<2x32x128xf32>
      tpu.vector_store %arg7[%c0_40, %c0_41, %c0_42], %44 {strides = array<i32>} : memref<2x32x128xf32, #tpu.memory_space<vmem>>, vector<2x32x128xf32>,
    } else {
    }
    %c0 = arith.constant 0 : index
    %c0_1 = arith.constant 0 : index
    %c0_2 = arith.constant 0 : index
    %3 = vector.load %arg2[%c0, %c0_1, %c0_2] : memref<2x32x256xf32, #tpu.memory_space<vmem>>, vector<1x32x128xf32>
    %4 = vector.shape_cast %3 : vector<1x32x128xf32> to vector<32x128xf32>
    %c0_3 = arith.constant 0 : index
    %c0_4 = arith.constant 0 : index
    %c128 = arith.constant 128 : index
    %5 = vector.load %arg2[%c0_3, %c0_4, %c128] : memref<2x32x256xf32, #tpu.memory_space<vmem>>, vector<1x32x128xf32>
    %6 = vector.shape_cast %5 : vector<1x32x128xf32> to vector<32x128xf32>
    %7 = arith.addf %4, %6 : vector<32x128xf32>
    %8 = arith.maximumf %4, %6 : vector<32x128xf32>
    %c0_5 = arith.constant 0 : index
    %c0_6 = arith.constant 0 : index
    %c0_7 = arith.constant 0 : index
    %9 = vector.load %arg6[%c0_5, %c0_6, %c0_7] : memref<2x32x128xf32, #tpu.memory_space<vmem>>, vector<1x32x128xf32>
    %10 = vector.shape_cast %9 : vector<1x32x128xf32> to vector<32x128xf32>
    %11 = arith.addf %10, %7 : vector<32x128xf32>
    %c0_8 = arith.constant 0 : index
    %c0_9 = arith.constant 0 : index
    %c0_10 = arith.constant 0 : index
    %12 = vector.load %arg6[%c0_8, %c0_9, %c0_10] : memref<2x32x128xf32, #tpu.memory_space<vmem>>, vector<1x32x128xf32>
    %13 = vector.shape_cast %12 : vector<1x32x128xf32> to vector<32x128xf32>
    %14 = vector.shape_cast %11 : vector<32x128xf32> to vector<1x32x128xf32>
    tpu.vector_store %arg6[%c0_8, %c0_9, %c0_10], %14 {strides = array<i32>} : memref<2x32x128xf32, #tpu.memory_space<vmem>>, vector<1x32x128xf32>,
    %c0_11 = arith.constant 0 : index
    %c0_12 = arith.constant 0 : index
    %c0_13 = arith.constant 0 : index
    %15 = vector.load %arg7[%c0_11, %c0_12, %c0_13] : memref<2x32x128xf32, #tpu.memory_space<vmem>>, vector<1x32x128xf32>
    %16 = vector.shape_cast %15 : vector<1x32x128xf32> to vector<32x128xf32>
    %17 = arith.maximumf %16, %8 : vector<32x128xf32>
    %c0_14 = arith.constant 0 : index
    %c0_15 = arith.constant 0 : index
    %c0_16 = arith.constant 0 : index
    %18 = vector.load %arg7[%c0_14, %c0_15, %c0_16] : memref<2x32x128xf32, #tpu.memory_space<vmem>>, vector<1x32x128xf32>
    %19 = vector.shape_cast %18 : vector<1x32x128xf32> to vector<32x128xf32>
    %20 = vector.shape_cast %17 : vector<32x128xf32> to vector<1x32x128xf32>
    tpu.vector_store %arg7[%c0_14, %c0_15, %c0_16], %20 {strides = array<i32>} : memref<2x32x128xf32, #tpu.memory_space<vmem>>, vector<1x32x128xf32>,
    %c1 = arith.constant 1 : index
    %c0_17 = arith.constant 0 : index
    %c0_18 = arith.constant 0 : index
    %21 = vector.load %arg2[%c1, %c0_17, %c0_18] : memref<2x32x256xf32, #tpu.memory_space<vmem>>, vector<1x32x128xf32>
    %22 = vector.shape_cast %21 : vector<1x32x128xf32> to vector<32x128xf32>
    %c1_19 = arith.constant 1 : index
    %c0_20 = arith.constant 0 : index
    %c128_21 = arith.constant 128 : index
    %23 = vector.load %arg2[%c1_19, %c0_20, %c128_21] : memref<2x32x256xf32, #tpu.memory_space<vmem>>, vector<1x32x128xf32>
    %24 = vector.shape_cast %23 : vector<1x32x128xf32> to vector<32x128xf32>
    %25 = arith.addf %22, %24 : vector<32x128xf32>
    %26 = arith.maximumf %22, %24 : vector<32x128xf32>
    %c1_22 = arith.constant 1 : index
    %c0_23 = arith.constant 0 : index
    %c0_24 = arith.constant 0 : index
    %27 = vector.load %arg6[%c1_22, %c0_23, %c0_24] : memref<2x32x128xf32, #tpu.memory_space<vmem>>, vector<1x32x128xf32>
    %28 = vector.shape_cast %27 : vector<1x32x128xf32> to vector<32x128xf32>
    %29 = arith.addf %28, %25 : vector<32x128xf32>
    %c1_25 = arith.constant 1 : index
    %c0_26 = arith.constant 0 : index
    %c0_27 = arith.constant 0 : index
    %30 = vector.load %arg6[%c1_25, %c0_26, %c0_27] : memref<2x32x128xf32, #tpu.memory_space<vmem>>, vector<1x32x128xf32>
    %31 = vector.shape_cast %30 : vector<1x32x128xf32> to vector<32x128xf32>
    %32 = vector.shape_cast %29 : vector<32x128xf32> to vector<1x32x128xf32>
    tpu.vector_store %arg6[%c1_25, %c0_26, %c0_27], %32 {strides = array<i32>} : memref<2x32x128xf32, #tpu.memory_space<vmem>>, vector<1x32x128xf32>,
    %c1_28 = arith.constant 1 : index
    %c0_29 = arith.constant 0 : index
    %c0_30 = arith.constant 0 : index
    %33 = vector.load %arg7[%c1_28, %c0_29, %c0_30] : memref<2x32x128xf32, #tpu.memory_space<vmem>>, vector<1x32x128xf32>
    %34 = vector.shape_cast %33 : vector<1x32x128xf32> to vector<32x128xf32>
    %35 = arith.maximumf %34, %26 : vector<32x128xf32>
    %c1_31 = arith.constant 1 : index
    %c0_32 = arith.constant 0 : index
    %c0_33 = arith.constant 0 : index
    %36 = vector.load %arg7[%c1_31, %c0_32, %c0_33] : memref<2x32x128xf32, #tpu.memory_space<vmem>>, vector<1x32x128xf32>
    %37 = vector.shape_cast %36 : vector<1x32x128xf32> to vector<32x128xf32>
    %38 = vector.shape_cast %35 : vector<32x128xf32> to vector<1x32x128xf32>
    tpu.vector_store %arg7[%c1_31, %c0_32, %c0_33], %38 {strides = array<i32>} : memref<2x32x128xf32, #tpu.memory_space<vmem>>, vector<1x32x128xf32>,
    %c0_i32_34 = arith.constant 0 : i32
    %39 = arith.cmpi eq, %arg1, %c0_i32_34 : i32
    %40 = arith.extui %39 : i1 to i32
    %c0_i32_35 = arith.constant 0 : i32
    %41 = arith.cmpi ne, %40, %c0_i32_35 : i32
    scf.if %41 {
      %c0_36 = arith.constant 0 : index
      %c0_37 = arith.constant 0 : index
      %c0_38 = arith.constant 0 : index
      %42 = vector.load %arg6[%c0_36, %c0_37, %c0_38] : memref<2x32x128xf32, #tpu.memory_space<vmem>>, vector<2x32x128xf32>
      %cst = arith.constant dense<0.000000e+00> : vector<2x32xf32>
      %43 = vector.multi_reduction <add>, %42, %cst [2] : vector<2x32x128xf32> to vector<2x32xf32>
      %cst_39 = arith.constant 3.906250e-03 : f32
      %44 = vector.broadcast %cst_39 : f32 to vector<2x32xf32>
      %45 = arith.mulf %43, %44 : vector<2x32xf32>
      %c0_40 = arith.constant 0 : index
      %c0_41 = arith.constant 0 : index
      %c0_42 = arith.constant 0 : index
      %46 = vector.load %arg7[%c0_40, %c0_41, %c0_42] : memref<2x32x128xf32, #tpu.memory_space<vmem>>, vector<2x32x128xf32>
      %cst_43 = arith.constant dense<0xFF800000> : vector<2x32xf32>
      %47 = vector.multi_reduction <maximumf>, %46, %cst_43 [2] : vector<2x32x128xf32> to vector<2x32xf32>
      %48 = tpu.concatenate %45, %47 in 0 : vector<2x32xf32>, vector<2x32xf32> -> vector<4x32xf32>
      %c0_44 = arith.constant 0 : index
      %c0_45 = arith.constant 0 : index
      %49 = vector.load %arg3[%c0_44, %c0_45] : memref<32x2xf32, #tpu.memory_space<vmem>>, vector<32x2xf32>
      %cst_46 = arith.constant dense<0.000000e+00> : vector<4x2xf32>
      %50 = tpu.matmul %48, %49, %cst_46 {dimension_numbers = #tpu.dot_dimension_numbers<[1], [0], [0], [1], [0, 0, 1, 1], [], []>} : vector<4x32xf32>, vector<32x2xf32>, vector<4x2xf32> -> vector<4x2xf32>
      %cst_47 = arith.constant 0.000000e+00 : f32
      %51 = vector.broadcast %cst_47 : f32 to vector<4x2xf32>
      %52 = arith.maximumf %50, %51 : vector<4x2xf32>
      %53 = vector.extract_strided_slice %52 {offsets = [0, 0], sizes = [2, 2], strides = [1, 1]} : vector<4x2xf32> to vector<2x2xf32>
      %54 = vector.extract_strided_slice %52 {offsets = [2, 0], sizes = [2, 2], strides = [1, 1]} : vector<4x2xf32> to vector<2x2xf32>
      %55 = arith.addf %53, %54 : vector<2x2xf32>
      %c0_48 = arith.constant 0 : index
      %c0_49 = arith.constant 0 : index
      %56 = vector.load %arg4[%c0_48, %c0_49] : memref<2x32xf32, #tpu.memory_space<vmem>>, vector<2x32xf32>
      %cst_50 = arith.constant dense<0.000000e+00> : vector<2x32xf32>
      %57 = tpu.matmul %55, %56, %cst_50 {dimension_numbers = #tpu.dot_dimension_numbers<[1], [0], [0], [1], [0, 0, 1, 1], [], []>} : vector<2x2xf32>, vector<2x32xf32>, vector<2x32xf32> -> vector<2x32xf32>
      %58 = arith.negf %57 : vector<2x32xf32>
      %59 = math.exp %58 : vector<2x32xf32>
      %cst_51 = arith.constant 1.000000e+00 : f32
      %60 = vector.broadcast %cst_51 : f32 to vector<2x32xf32>
      %61 = arith.addf %60, %59 : vector<2x32xf32>
      %62 = arith.divf %60, %61 : vector<2x32xf32>
      %c0_52 = arith.constant 0 : index
      %c0_53 = arith.constant 0 : index
      %63 = vector.load %arg5[%c0_52, %c0_53] : memref<2x32xf32, #tpu.memory_space<vmem>>, vector<2x32xf32>
      tpu.vector_store %arg5[%c0_52, %c0_53], %62 {strides = array<i32>} : memref<2x32xf32, #tpu.memory_space<vmem>>, vector<2x32xf32>,
    } else {
    }
    return
  }
  func.func @transform_0(%arg0: i32, %arg1: i32) -> (i32, i32, i32) {
    %c0_i32 = arith.constant 0 : i32
    %c0_i32_0 = arith.constant 0 : i32
    return %arg0, %c0_i32, %arg1 : i32, i32, i32
  }
  func.func @transform_1(%arg0: i32, %arg1: i32) -> (i32, i32) {
    %c0_i32 = arith.constant 0 : i32
    %c0_i32_0 = arith.constant 0 : i32
    %c0_i32_1 = arith.constant 0 : i32
    return %c0_i32, %c0_i32_0 : i32, i32
  }
  func.func @transform_2(%arg0: i32, %arg1: i32) -> (i32, i32) {
    %c0_i32 = arith.constant 0 : i32
    %c0_i32_0 = arith.constant 0 : i32
    %c0_i32_1 = arith.constant 0 : i32
    return %c0_i32, %c0_i32_0 : i32, i32
  }
  func.func @transform_3(%arg0: i32, %arg1: i32) -> (i32, i32) {
    %c0_i32 = arith.constant 0 : i32
    %c0_i32_0 = arith.constant 0 : i32
    return %arg0, %c0_i32 : i32, i32
  }
}

</mosaic_0001>

<llo_original>
// kernel: tpu_custom_call.1
$region0: #{tpu_custom_call.1}
  #allocation0 [shape = 'u32[]', space=smem, size = 0x4, offset = 0x4, fixed_abs, tag = 'smem constant byte address 0x4 - core index']
  #allocation1 [shape = 'u32[144,128]{1,0:T(1,128)}', space=vmem, size = 0x12000, scoped, tag = 'internal scratch']
  #allocation2 [shape = 'f32[2,32,128]{2,1,0:T(8,128)}', space=vmem, size = 0x8000, scoped, tag = 'scratch operand']
  #allocation3 [shape = 'f32[2,32,128]{2,1,0:T(8,128)}', space=vmem, size = 0x8000, scoped, tag = 'scratch operand']
  %s0 = inlined_call_operand.hbm [shape: f32[2,32,256], index: 0, kind: input, shape index: {}]
  %s1 = inlined_call_operand.vmem [shape: f32[32,2], index: 1, kind: input, shape index: {}]
  %s2 = inlined_call_operand.vmem [shape: f32[2,32], index: 2, kind: input, shape index: {}]
  %s3 = inlined_call_operand.hbm [shape: f32[2,32], index: 3, kind: output, shape index: {}]
  %s4 = sld [smem:[#allocation0]]
  $region34: #{tpu_custom_call.1} parent=0
    _
  %s6 = ssub.s32 1, %s4
  %s7 = scalar_select 0, %s6, %s4
  $region1: #{tpu_custom_call.1} parent=0
    #allocation4 [shape = 'u8[65536]{0}', space=vmem, size = 0x10000, scoped, tag = 'input window, operand 0, single buffered']
    #allocation5 [shape = 's32[1]{0}', space=sflag, size = 0x4, scoped, tag = 'scoped memory for tpu_custom_call.1']
    #allocation6 [shape = 's32[1]{0}', space=sflag, size = 0x4, scoped, tag = 'scoped memory for tpu_custom_call.1']
    #allocation7 [shape = 'u8[1024]{0}', space=vmem, size = 0x400, scoped, tag = 'output window, operand 0, single buffered']
    %8 = vsyncpa [#allocation5], 0
    %9 = vsyncpa [#allocation6], 0
    // Predicated region
    $region2: #{tpu_custom_call.1} parent=1 // pred_check
      _
    $region3: #{tpu_custom_call.1} parent=1 // pred_check_branch
      %11 = sbr.rel (0) target = $region5
    $region4: #{tpu_custom_call.1} parent=1 // pred_region
      %s13 = ssub.s32 2048, 2048
      %14 = vsyncadd [#allocation5], %s13
      %s15 = sshll.u32 [#allocation4], 4
      %s16 = int_to_ptr.vmem [resolvable:$true] %s15
      %21 = dma.hbm_to_vmem [thread:$0]  %s0, 2048, %s16, [#allocation5], 256, 256, 16
    $region5: #{tpu_custom_call.1} parent=1 // pred_fallthru
      _
    // Predicated region
    $region6: #{tpu_custom_call.1} parent=1 // pred_check
      _
    $region7: #{tpu_custom_call.1} parent=1 // pred_check_branch
      %23 = sbr.rel (0) target = $region9
    $region8: #{tpu_custom_call.1} parent=1 // pred_region
      _
    $region9: #{tpu_custom_call.1} parent=1 // pred_fallthru
      _
    // Predicated region
    $region10: #{tpu_custom_call.1} parent=1 // pred_check
      _
    $region11: #{tpu_custom_call.1} parent=1 // pred_check_branch
      %25 = sbr.rel (0) target = $region13
    $region12: #{tpu_custom_call.1} parent=1 // pred_region
      _
    $region13: #{tpu_custom_call.1} parent=1 // pred_fallthru
      _
    // Predicated region
    $region14: #{tpu_custom_call.1} parent=1 // pred_check
      _
    $region15: #{tpu_custom_call.1} parent=1 // pred_check_branch
      %27 = sbr.rel (0) target = $region17
    $region16: #{tpu_custom_call.1} parent=1 // pred_region
      %28 = dma.done [#allocation5], 2048
    $region17: #{tpu_custom_call.1} parent=1 // pred_fallthru
      _
    %p29 = scmp.eq.s32.totalorder 0, 0
    // Predicated region
    $region18: #{tpu_custom_call.1} parent=1 // pred_check
      %p30 = pneg %p29
    $region19: #{tpu_custom_call.1} parent=1 // pred_check_branch
      %32 = sbr.rel (%p30) target = $region21
    $region20: #{tpu_custom_call.1} parent=1 // pred_region
      %33 = vst [vmem:[#allocation2] sm:$0xff] 0.0
      %34 = vst [vmem:[#allocation2 + $0x8] sm:$0xff] 0.0
      %35 = vst [vmem:[#allocation2 + $0x10] sm:$0xff] 0.0
      %36 = vst [vmem:[#allocation2 + $0x18] sm:$0xff] 0.0
      %37 = vst [vmem:[#allocation2 + $0x20] sm:$0xff] 0.0
      %38 = vst [vmem:[#allocation2 + $0x28] sm:$0xff] 0.0
      %39 = vst [vmem:[#allocation2 + $0x30] sm:$0xff] 0.0
      %40 = vst [vmem:[#allocation2 + $0x38] sm:$0xff] 0.0
      %41 = vst [vmem:[#allocation3] sm:$0xff] -inf
      %42 = vst [vmem:[#allocation3 + $0x8] sm:$0xff] -inf
      %43 = vst [vmem:[#allocation3 + $0x10] sm:$0xff] -inf
      %44 = vst [vmem:[#allocation3 + $0x18] sm:$0xff] -inf
      %45 = vst [vmem:[#allocation3 + $0x20] sm:$0xff] -inf
      %46 = vst [vmem:[#allocation3 + $0x28] sm:$0xff] -inf
      %47 = vst [vmem:[#allocation3 + $0x30] sm:$0xff] -inf
      %48 = vst [vmem:[#allocation3 + $0x38] sm:$0xff] -inf
    $region21: #{tpu_custom_call.1} parent=1 // pred_fallthru
      _
    %v49 = vld [vmem:[#allocation4] sm:$0xff]
    %v50 = vld [vmem:[#allocation4 + $0x10] sm:$0xff]
    %v51 = vld [vmem:[#allocation4 + $0x20] sm:$0xff]
    %v52 = vld [vmem:[#allocation4 + $0x30] sm:$0xff]
    %v53 = vld [vmem:[#allocation4 + $0x8] sm:$0xff]
    %v54 = vld [vmem:[#allocation4 + $0x18] sm:$0xff]
    %v55 = vld [vmem:[#allocation4 + $0x28] sm:$0xff]
    %v56 = vld [vmem:[#allocation4 + $0x38] sm:$0xff]
    %v57 = vadd.f32 %v49, %v53
    %v58 = vadd.f32 %v50, %v54
    %v59 = vadd.f32 %v51, %v55
    %v60 = vadd.f32 %v52, %v56
    %v61 = vmax.f32 %v49, %v53
    %v62 = vmax.f32 %v50, %v54
    %v63 = vmax.f32 %v51, %v55
    %v64 = vmax.f32 %v52, %v56
    %v65 = vld [vmem:[#allocation2] sm:$0xff]
    %v66 = vld [vmem:[#allocation2 + $0x8] sm:$0xff]
    %v67 = vld [vmem:[#allocation2 + $0x10] sm:$0xff]
    %v68 = vld [vmem:[#allocation2 + $0x18] sm:$0xff]
    %v69 = vadd.f32 %v65, %v57
    %v70 = vadd.f32 %v66, %v58
    %v71 = vadd.f32 %v67, %v59
    %v72 = vadd.f32 %v68, %v60
    %73 = vst [vmem:[#allocation2] sm:$0xff] %v69
    %74 = vst [vmem:[#allocation2 + $0x8] sm:$0xff] %v70
    %75 = vst [vmem:[#allocation2 + $0x10] sm:$0xff] %v71
    %76 = vst [vmem:[#allocation2 + $0x18] sm:$0xff] %v72
    %v77 = vld [vmem:[#allocation3] sm:$0xff]
    %v78 = vld [vmem:[#allocation3 + $0x8] sm:$0xff]
    %v79 = vld [vmem:[#allocation3 + $0x10] sm:$0xff]
    %v80 = vld [vmem:[#allocation3 + $0x18] sm:$0xff]
    %v81 = vmax.f32 %v77, %v61
    %v82 = vmax.f32 %v78, %v62
    %v83 = vmax.f32 %v79, %v63
    %v84 = vmax.f32 %v80, %v64
    %85 = vst [vmem:[#allocation3] sm:$0xff] %v81
    %86 = vst [vmem:[#allocation3 + $0x8] sm:$0xff] %v82
    %87 = vst [vmem:[#allocation3 + $0x10] sm:$0xff] %v83
    %88 = vst [vmem:[#allocation3 + $0x18] sm:$0xff] %v84
    %s89 = scalar_lea.vmem [#allocation4], 64
    %v90 = vld [vmem:[%s89] sm:$0xff]
    %v91 = vld [vmem:[%s89 + $0x10] sm:$0xff]
    %v92 = vld [vmem:[%s89 + $0x20] sm:$0xff]
    %v93 = vld [vmem:[%s89 + $0x30] sm:$0xff]
    %v94 = vld [vmem:[%s89 + $0x8] sm:$0xff]
    %v95 = vld [vmem:[%s89 + $0x18] sm:$0xff]
    %v96 = vld [vmem:[%s89 + $0x28] sm:$0xff]
    %v97 = vld [vmem:[%s89 + $0x38] sm:$0xff]
    %v98 = vadd.f32 %v90, %v94
    %v99 = vadd.f32 %v91, %v95
    %v100 = vadd.f32 %v92, %v96
    %v101 = vadd.f32 %v93, %v97
    %v102 = vmax.f32 %v90, %v94
    %v103 = vmax.f32 %v91, %v95
    %v104 = vmax.f32 %v92, %v96
    %v105 = vmax.f32 %v93, %v97
    %s106 = scalar_lea.vmem [#allocation2], 32
    %v107 = vld [vmem:[%s106] sm:$0xff]
    %v108 = vld [vmem:[%s106 + $0x8] sm:$0xff]
    %v109 = vld [vmem:[%s106 + $0x10] sm:$0xff]
    %v110 = vld [vmem:[%s106 + $0x18] sm:$0xff]
    %v111 = vadd.f32 %v107, %v98
    %v112 = vadd.f32 %v108, %v99
    %v113 = vadd.f32 %v109, %v100
    %v114 = vadd.f32 %v110, %v101
    %115 = vst [vmem:[%s106] sm:$0xff] %v111
    %116 = vst [vmem:[%s106 + $0x8] sm:$0xff] %v112
    %117 = vst [vmem:[%s106 + $0x10] sm:$0xff] %v113
    %118 = vst [vmem:[%s106 + $0x18] sm:$0xff] %v114
    %s119 = scalar_lea.vmem [#allocation3], 32
    %v120 = vld [vmem:[%s119] sm:$0xff]
    %v121 = vld [vmem:[%s119 + $0x8] sm:$0xff]
    %v122 = vld [vmem:[%s119 + $0x10] sm:$0xff]
    %v123 = vld [vmem:[%s119 + $0x18] sm:$0xff]
    %v124 = vmax.f32 %v120, %v102
    %v125 = vmax.f32 %v121, %v103
    %v126 = vmax.f32 %v122, %v104
    %v127 = vmax.f32 %v123, %v105
    %128 = vst [vmem:[%s119] sm:$0xff] %v124
    %129 = vst [vmem:[%s119 + $0x8] sm:$0xff] %v125
    %130 = vst [vmem:[%s119 + $0x10] sm:$0xff] %v126
    %131 = vst [vmem:[%s119 + $0x18] sm:$0xff] %v127
    // Predicated region
    $region22: #{tpu_custom_call.1} parent=1 // pred_check
      %p132 = pneg %p29
    $region23: #{tpu_custom_call.1} parent=1 // pred_check_branch
      %134 = sbr.rel (%p132) target = $region25
    $region24: #{tpu_custom_call.1} parent=1 // pred_region
      %v135 = vld [vmem:[#allocation2] sm:$0xff]
      %v136 = vld [vmem:[#allocation2 + $0x8] sm:$0xff]
      %v137 = vld [vmem:[#allocation2 + $0x10] sm:$0xff]
      %v138 = vld [vmem:[#allocation2 + $0x18] sm:$0xff]
      %v139 = vld [vmem:[#allocation2 + $0x20] sm:$0xff]
      %v140 = vld [vmem:[#allocation2 + $0x28] sm:$0xff]
      %v141 = vld [vmem:[#allocation2 + $0x30] sm:$0xff]
      %v142 = vld [vmem:[#allocation2 + $0x38] sm:$0xff]
      %143 = vadd.xlane.f32.xlu0 %v135
      %v144 = vpop.xlane.xlu0 %143
      %145 = vadd.xlane.f32.xlu0 %v136
      %v146 = vpop.xlane.xlu0 %145
      %147 = vadd.xlane.f32.xlu0 %v137
      %v148 = vpop.xlane.xlu0 %147
      %149 = vadd.xlane.f32.xlu0 %v138
      %v150 = vpop.xlane.xlu0 %149
      %151 = vadd.xlane.f32.xlu0 %v139
      %v152 = vpop.xlane.xlu0 %151
      %153 = vadd.xlane.f32.xlu0 %v140
      %v154 = vpop.xlane.xlu0 %153
      %155 = vadd.xlane.f32.xlu0 %v141
      %v156 = vpop.xlane.xlu0 %155
      %157 = vadd.xlane.f32.xlu0 %v142
      %v158 = vpop.xlane.xlu0 %157
      %v159 = vmul.f32 %v144, 0.00390625
      %v160 = vmul.f32 %v146, 0.00390625
      %v161 = vmul.f32 %v148, 0.00390625
      %v162 = vmul.f32 %v150, 0.00390625
      %v163 = vmul.f32 %v152, 0.00390625
      %v164 = vmul.f32 %v154, 0.00390625
      %v165 = vmul.f32 %v156, 0.00390625
      %v166 = vmul.f32 %v158, 0.00390625
      %v167 = vld [vmem:[#allocation3] sm:$0xff]
      %v168 = vld [vmem:[#allocation3 + $0x8] sm:$0xff]
      %v169 = vld [vmem:[#allocation3 + $0x10] sm:$0xff]
      %v170 = vld [vmem:[#allocation3 + $0x18] sm:$0xff]
      %v171 = vld [vmem:[#allocation3 + $0x20] sm:$0xff]
      %v172 = vld [vmem:[#allocation3 + $0x28] sm:$0xff]
      %v173 = vld [vmem:[#allocation3 + $0x30] sm:$0xff]
      %v174 = vld [vmem:[#allocation3 + $0x38] sm:$0xff]
      %175 = vmax.xlane.f32.xlu0 %v167
      %v176 = vpop.xlane.xlu0 %175
      %177 = vmax.xlane.f32.xlu0 %v168
      %v178 = vpop.xlane.xlu0 %177
      %179 = vmax.xlane.f32.xlu0 %v169
      %v180 = vpop.xlane.xlu0 %179
      %181 = vmax.xlane.f32.xlu0 %v170
      %v182 = vpop.xlane.xlu0 %181
      %183 = vmax.xlane.f32.xlu0 %v171
      %v184 = vpop.xlane.xlu0 %183
      %185 = vmax.xlane.f32.xlu0 %v172
      %v186 = vpop.xlane.xlu0 %185
      %187 = vmax.xlane.f32.xlu0 %v173
      %v188 = vpop.xlane.xlu0 %187
      %189 = vmax.xlane.f32.xlu0 %v174
      %v190 = vpop.xlane.xlu0 %189
      %v199 = vlaneseq
      %v200 = vand.u32 %v199, 127
      %v201 = vlaneseq
      %v202 = vshrl.u32 %v201, 7
      %v203 = vsub.s32 %v200, %v202
      %v204 = vrot.slane %v159, %v203
      %v205 = vadd.s32 %v200, 4294967288
      %v206 = vlaneseq
      %v207 = vshrl.u32 %v206, 7
      %v208 = vsub.s32 %v205, %v207
      %v209 = vrot.slane %v160, %v208
      %vm210 = vcmask 130112
      %v211 = vsel %vm210, %v209, %v204
      %v212 = vadd.s32 %v200, 4294967280
      %v213 = vlaneseq
      %v214 = vshrl.u32 %v213, 7
      %v215 = vsub.s32 %v212, %v214
      %v216 = vrot.slane %v161, %v215
      %vm217 = vcmask 195712
      %v218 = vsel %vm217, %v216, %v211
      %v219 = vadd.s32 %v200, 4294967272
      %v220 = vlaneseq
      %v221 = vshrl.u32 %v220, 7
      %v222 = vsub.s32 %v219, %v221
      %v223 = vrot.slane %v162, %v222
      %vm224 = vcmask 261312
      %v225 = vsel %vm224, %v223, %v218
      %v226 = vlaneseq
      %v227 = vshrl.u32 %v226, 7
      %v228 = vsub.s32 %v200, %v227
      %v229 = vrot.slane %v163, %v228
      %v230 = vlaneseq
      %v231 = vshrl.u32 %v230, 7
      %v232 = vsub.s32 %v205, %v231
      %v233 = vrot.slane %v164, %v232
      %v234 = vsel %vm210, %v233, %v229
      %v235 = vlaneseq
      %v236 = vshrl.u32 %v235, 7
      %v237 = vsub.s32 %v212, %v236
      %v238 = vrot.slane %v165, %v237
      %v239 = vsel %vm217, %v238, %v234
      %v240 = vlaneseq
      %v241 = vshrl.u32 %v240, 7
      %v242 = vsub.s32 %v219, %v241
      %v243 = vrot.slane %v166, %v242
      %v244 = vsel %vm224, %v243, %v239
      %vm245 = vcmask 1041409
      %v246 = vsel %vm245, %v244, %v225
      %v256 = vlaneseq
      %v257 = vshrl.u32 %v256, 7
      %v258 = vsub.s32 %v200, %v257
      %v259 = vrot.slane %v176, %v258
      %v260 = vlaneseq
      %v261 = vshrl.u32 %v260, 7
      %v262 = vsub.s32 %v205, %v261
      %v263 = vrot.slane %v178, %v262
      %v264 = vsel %vm210, %v263, %v259
      %v265 = vlaneseq
      %v266 = vshrl.u32 %v265, 7
      %v267 = vsub.s32 %v212, %v266
      %v268 = vrot.slane %v180, %v267
      %v269 = vsel %vm217, %v268, %v264
      %v270 = vlaneseq
      %v271 = vshrl.u32 %v270, 7
      %v272 = vsub.s32 %v219, %v271
      %v273 = vrot.slane %v182, %v272
      %v274 = vsel %vm224, %v273, %v269
      %v275 = vlaneseq
      %v276 = vshrl.u32 %v275, 7
      %v277 = vsub.s32 %v200, %v276
      %v278 = vrot.slane %v184, %v277
      %v279 = vlaneseq
      %v280 = vshrl.u32 %v279, 7
      %v281 = vsub.s32 %v205, %v280
      %v282 = vrot.slane %v186, %v281
      %v283 = vsel %vm210, %v282, %v278
      %v284 = vlaneseq
      %v285 = vshrl.u32 %v284, 7
      %v286 = vsub.s32 %v212, %v285
      %v287 = vrot.slane %v188, %v286
      %v288 = vsel %vm217, %v287, %v283
      %v289 = vlaneseq
      %v290 = vshrl.u32 %v289, 7
      %v291 = vsub.s32 %v219, %v290
      %v292 = vrot.slane %v190, %v291
      %v293 = vsel %vm224, %v292, %v288
      %vm294 = vcmask 1043459
      %v295 = vsel %vm294, %v293, %v274
      %vm297 = vcmask 1041408
      %v298 = vsel %vm297, %v246, %v295
      %v299 = vld [vmem:[%s1] sm:$0xff]
      %v300 = vld [vmem:[%s1 + $0x8] sm:$0xff]
      %v301 = vld [vmem:[%s1 + $0x10] sm:$0xff]
      %v302 = vld [vmem:[%s1 + $0x18] sm:$0xff]
      %vm303 = vcmask 261120
      %v305 = vsel %vm303, %v298, 0
      %307 = vmatprep.subr.mxu0 0.0
      %308 = vmatpush1.msra.mxu0 0.0
      %309 = vmatprep.subr.mxu0 0.0
      %310 = vmatpush1.msra.mxu0 0.0
      %311 = vmatprep.subr.mxu0 0.0
      %312 = vmatpush1.msra.mxu0 0.0
      %313 = vmatprep.subr.mxu0 0.0
      %314 = vmatpush1.msra.mxu0 0.0
      %315 = vmatprep.subr.mxu0 0.0
      %316 = vmatpush1.msra.mxu0 0.0
      %317 = vmatprep.subr.mxu0 0.0
      %318 = vmatpush1.msra.mxu0 0.0
      %319 = vmatprep.subr.mxu0 0.0
      %320 = vmatpush1.msra.mxu0 0.0
      %321 = vmatprep.subr.mxu0 0.0
      %322 = vmatpush1.msra.mxu0 0.0
      %323 = vmatprep.subr.mxu0 0.0
      %324 = vmatpush1.msra.mxu0 0.0
      %325 = vmatprep.subr.mxu0 0.0
      %326 = vmatpush1.msra.mxu0 0.0
      %327 = vmatprep.subr.mxu0 0.0
      %328 = vmatpush1.msra.mxu0 0.0
      %329 = vmatprep.subr.mxu0 0.0
      %330 = vmatpush1.msra.mxu0 0.0
      %331 = vmatprep.subr.mxu0 0.0
      %332 = vmatpush1.msra.mxu0 %v302
      %333 = vmatprep.subr.mxu0 0.0
      %334 = vmatpush1.msra.mxu0 %v301
      %335 = vmatprep.subr.mxu0 0.0
      %336 = vmatpush1.msra.mxu0 %v300
      %337 = vmatprep.subr.mxu0 0.0
      %338 = vmatpush1.msra.mxu0 %v299
      %339 = vmatprep.subr.mxu0 0.0
      %340 = vmatpush2.msra.mxu0 0.0
      %341 = vmatprep.subr.mxu0 0.0
      %342 = vmatpush2.msra.mxu0 0.0
      %343 = vmatprep.subr.mxu0 0.0
      %344 = vmatpush2.msra.mxu0 0.0
      %345 = vmatprep.subr.mxu0 0.0
      %346 = vmatpush2.msra.mxu0 0.0
      %347 = vmatprep.subr.mxu0 0.0
      %348 = vmatpush2.msra.mxu0 0.0
      %349 = vmatprep.subr.mxu0 0.0
      %350 = vmatpush2.msra.mxu0 0.0
      %351 = vmatprep.subr.mxu0 0.0
      %352 = vmatpush2.msra.mxu0 0.0
      %353 = vmatprep.subr.mxu0 0.0
      %354 = vmatpush2.msra.mxu0 0.0
      %355 = vmatprep.subr.mxu0 0.0
      %356 = vmatpush2.msra.mxu0 0.0
      %357 = vmatprep.subr.mxu0 0.0
      %358 = vmatpush2.msra.mxu0 0.0
      %359 = vmatprep.subr.mxu0 0.0
      %360 = vmatpush2.msra.mxu0 0.0
      %361 = vmatprep.subr.mxu0 0.0
      %362 = vmatpush2.msra.mxu0 0.0
      %363 = vmatprep.subr.mxu0 0.0
      %364 = vmatpush2.msra.mxu0 0.0
      %365 = vmatprep.subr.mxu0 0.0
      %366 = vmatpush2.msra.mxu0 0.0
      %367 = vmatprep.subr.mxu0 0.0
      %368 = vmatpush2.msra.mxu0 0.0
      %369 = vmatprep.subr.mxu0 0.0
      %370 = vmatpush2.msra.mxu0 0.0
      %371 = vmatprep.mubr.f32.mxu0 0.0
      %372 = vmatmul.mubr.f32.gmra.mxu0 %v305
      %v373 = vpop.f32.mrf.mxu0
      %v374 = vadd.f32 0.0, %v373
      %v375 = vpop.f32.mrf.mxu0
      %376 = vdwg.mxu0
      %v377 = vmax.f32 %v374, 0.0
      %v379 = vrot.slane %v377, 2
      %v381 = vadd.f32 %v377, %v379
      %v382 = vld [vmem:[%s2] sm:$0x3]
      %vm383 = vcmask 15360
      %v385 = vsel %vm383, %v381, 0
      %v388 = vsel %vm297, %v382, 0
      %390 = vmatprep.subr.mxu0 0.0
      %391 = vmatpush1.msra.mxu0 0.0
      %392 = vmatprep.subr.mxu0 0.0
      %393 = vmatpush1.msra.mxu0 0.0
      %394 = vmatprep.subr.mxu0 0.0
      %395 = vmatpush1.msra.mxu0 0.0
      %396 = vmatprep.subr.mxu0 0.0
      %397 = vmatpush1.msra.mxu0 0.0
      %398 = vmatprep.subr.mxu0 0.0
      %399 = vmatpush1.msra.mxu0 0.0
      %400 = vmatprep.subr.mxu0 0.0
      %401 = vmatpush1.msra.mxu0 0.0
      %402 = vmatprep.subr.mxu0 0.0
      %403 = vmatpush1.msra.mxu0 0.0
      %404 = vmatprep.subr.mxu0 0.0
      %405 = vmatpush1.msra.mxu0 0.0
      %406 = vmatprep.subr.mxu0 0.0
      %407 = vmatpush1.msra.mxu0 0.0
      %408 = vmatprep.subr.mxu0 0.0
      %409 = vmatpush1.msra.mxu0 0.0
      %410 = vmatprep.subr.mxu0 0.0
      %411 = vmatpush1.msra.mxu0 0.0
      %412 = vmatprep.subr.mxu0 0.0
      %413 = vmatpush1.msra.mxu0 0.0
      %414 = vmatprep.subr.mxu0 0.0
      %415 = vmatpush1.msra.mxu0 0.0
      %416 = vmatprep.subr.mxu0 0.0
      %417 = vmatpush1.msra.mxu0 0.0
      %418 = vmatprep.subr.mxu0 0.0
      %419 = vmatpush1.msra.mxu0 0.0
      %420 = vmatprep.subr.mxu0 0.0
      %421 = vmatpush1.msra.mxu0 %v388
      %422 = vmatprep.subr.mxu0 0.0
      %423 = vmatpush2.msra.mxu0 0.0
      %424 = vmatprep.subr.mxu0 0.0
      %425 = vmatpush2.msra.mxu0 0.0
      %426 = vmatprep.subr.mxu0 0.0
      %427 = vmatpush2.msra.mxu0 0.0
      %428 = vmatprep.subr.mxu0 0.0
      %429 = vmatpush2.msra.mxu0 0.0
      %430 = vmatprep.subr.mxu0 0.0
      %431 = vmatpush2.msra.mxu0 0.0
      %432 = vmatprep.subr.mxu0 0.0
      %433 = vmatpush2.msra.mxu0 0.0
      %434 = vmatprep.subr.mxu0 0.0
      %435 = vmatpush2.msra.mxu0 0.0
      %436 = vmatprep.subr.mxu0 0.0
      %437 = vmatpush2.msra.mxu0 0.0
      %438 = vmatprep.subr.mxu0 0.0
      %439 = vmatpush2.msra.mxu0 0.0
      %440 = vmatprep.subr.mxu0 0.0
      %441 = vmatpush2.msra.mxu0 0.0
      %442 = vmatprep.subr.mxu0 0.0
      %443 = vmatpush2.msra.mxu0 0.0
      %444 = vmatprep.subr.mxu0 0.0
      %445 = vmatpush2.msra.mxu0 0.0
      %446 = vmatprep.subr.mxu0 0.0
      %447 = vmatpush2.msra.mxu0 0.0
      %448 = vmatprep.subr.mxu0 0.0
      %449 = vmatpush2.msra.mxu0 0.0
      %450 = vmatprep.subr.mxu0 0.0
      %451 = vmatpush2.msra.mxu0 0.0
      %452 = vmatprep.subr.mxu0 0.0
      %453 = vmatpush2.msra.mxu0 0.0
      %454 = vmatprep.mubr.f32.mxu0 0.0
      %455 = vmatmul.mubr.f32.gmra.mxu0 %v385
      %v456 = vpop.f32.mrf.mxu0
      %v457 = vadd.f32 0.0, %v456
      %v458 = vpop.f32.mrf.mxu0
      %459 = vdwg.mxu0
      %v460 = vxor.u32 %v457, 2147483648
      %v461 = vmul.f32 %v460, 1.442695
      %v462 = vpow.pop %v461
      %v463 = vadd.f32 %v462, 1.0
      %v464 = vrcp.pop %v463
      %v465 = vmul.f32 1.0, %v464
      %vm466 = vcmask 254976
      %467 = vst.msk [vmem:[#allocation7] sm:$0x3] %vm466, %v465
    $region25: #{tpu_custom_call.1} parent=1 // pred_fallthru
      _
    // Predicated region
    $region26: #{tpu_custom_call.1} parent=1 // pred_check
      _
    $region27: #{tpu_custom_call.1} parent=1 // pred_check_branch
      %469 = sbr.rel (0) target = $region29
    $region28: #{tpu_custom_call.1} parent=1 // pred_region
      %s471 = ssub.s32 32, 32
      %472 = vsyncadd [#allocation6], %s471
      %s474 = sshll.u32 [#allocation7], 4
      %s475 = int_to_ptr.vmem [resolvable:$true] %s474
      %477 = dma.vmem_to_hbm [thread:$0]  %s475, 32, %s3, [#allocation6]
    $region29: #{tpu_custom_call.1} parent=1 // pred_fallthru
      _
    // Predicated region
    $region30: #{tpu_custom_call.1} parent=1 // pred_check
      _
    $region31: #{tpu_custom_call.1} parent=1 // pred_check_branch
      %479 = sbr.rel (0) target = $region33
    $region32: #{tpu_custom_call.1} parent=1 // pred_region
      %480 = dma.done [#allocation6], 32
    $region33: #{tpu_custom_call.1} parent=1 // pred_fallthru
      _
    %481 = vsyncpa [#allocation5], 1
    %482 = vsyncpa [#allocation6], 1

</llo_original>
